<compile_context>
chip_gen: v7x
topology: tpu7x:2x2x1
jax: 0.10.0
libtpu: 0.0.40
codegen_flags: <defaults>
</compile_context>

<pallas_src>
import functools

import jax
import jax.numpy as jnp
from jax import lax
from jax.experimental import pallas as pl
from jax.experimental.pallas import tpu as pltpu


def _round_up(x, m):
    return ((x + m - 1) // m) * m


def _vmem_budget_bytes():
    """Per-generation scoped-VMEM target (conservative fallback elsewhere)."""
    kind = ""
    try:
        kind = jax.devices()[0].device_kind.lower()
    except Exception:
        pass
    if "v7" in kind:                      # v7x: 64 MiB physical per TensorCore
        return 40 * 1024 * 1024
    if any(t in kind for t in ("v5e", "v5 lite", "v5lite", "v6")):
        return 80 * 1024 * 1024           # v5e / v6e: 128 MiB physical
    return 28 * 1024 * 1024               # unknown generation: stay conservative


def _step_vmem_bytes(bt, c_pad, n_pad):
    """Rough per-grid-step VMEM footprint estimate (double-buffered I/O + intermediates)."""
    io = 2 * bt * c_pad * n_pad * (2 + 4)            # bf16 in block + f32 out block, x2 buffers
    const = 2 * (3 * c_pad * c_pad * 2 + c_pad * 4)  # stacked weights + bias row
    inter = 48 * c_pad * n_pad + 12 * c_pad * c_pad  # y (3c,N) f32, exp/softmax, bf16 copies, masks
    return io + const + inter


def _pick_batch_block(b, c_pad, n_pad, budget):
    """Largest divisor of b that fits the VMEM budget, preferring an even >=2-step grid."""
    divisors = [d for d in range(1, b + 1) if b % d == 0]
    feasible = [d for d in divisors if _step_vmem_bytes(d, c_pad, n_pad) <= budget]
    if not feasible:
        return 1
    even_multi = [d for d in feasible if (b // d) >= 2 and (b // d) % 2 == 0]
    multi = [d for d in feasible if (b // d) >= 2]
    if even_multi:
        return max(even_multi)
    if multi:
        return max(multi)
    return max(feasible)


def _make_kernel(bt, c_pad, n_pad, c_valid, n_valid):
    inv_n = 1.0 / float(n_valid)          # mean over the ORIGINAL N spatial positions
    need_tail = n_pad > n_valid
    need_rows = c_pad > c_valid

    def kernel(w_ref, bias_ref, x_ref, o_ref):
        # w_ref:    (3*c_pad, c_pad) bf16, stacked [wA; wB; wV]
        # bias_ref: (1, c_pad) f32, convA bias pre-scaled by 1/N
        # x_ref:    (bt, c_pad, n_pad) bf16
        # o_ref:    (bt, c_pad, n_pad) f32
        w = w_ref[...]
        bias_row = bias_ref[...]

        # Hoisted loop-invariant masks (computed once per grid step).
        if need_tail:
            col = lax.broadcasted_iota(jnp.int32, (c_pad, n_pad), 1)
            tail_add = jnp.where(col < n_valid, 0.0, -1e30).astype(jnp.float32)
        else:
            tail_add = None
        if need_rows:
            row = lax.broadcasted_iota(jnp.int32, (c_pad, n_pad), 0)
            row_keep = (row < c_valid).astype(jnp.float32)
        else:
            row_keep = None

        def one_item(bi):
            x = x_ref[bi]                                           # (c_pad, n_pad) bf16
            # One wide MXU matmul -> all three "1x1 conv" outputs, f32 accumulation.
            y = jnp.dot(w, x, preferred_element_type=jnp.float32)   # (3*c_pad, n_pad)
            a_map = y[0:c_pad]                                      # convA(x) - bias (folded later)
            b_map = y[c_pad:2 * c_pad]                              # convB(x) - bias (softmax shift-inv.)
            v_map = y[2 * c_pad:3 * c_pad]                          # convV(x) - bias (softmax shift-inv.)
            if need_tail:
                b_map = b_map + tail_add
                v_map = v_map + tail_add

            # softmax(B) over spatial dim, with 1/N folded into the reciprocal.
            b_max = jnp.max(b_map, axis=-1, keepdims=True)
            b_exp = jnp.exp(b_map - b_max)
            b_sum = jnp.sum(b_exp, axis=-1, keepdims=True)
            soft_b = b_exp * (pl.reciprocal(b_sum, approx=False) * inv_n)

            # softmax(V) over spatial dim.
            v_max = jnp.max(v_map, axis=-1, keepdims=True)
            v_exp = jnp.exp(v_map - v_max)
            v_sum = jnp.sum(v_exp, axis=-1, keepdims=True)
            soft_v = v_exp * pl.reciprocal(v_sum, approx=True)
            if need_rows:
                soft_v = soft_v * row_keep                          # zero padded channels

            # gd[i, j] = sum_m softB[i,m] * A[j,m] / N  +  bA[j] / N   (NT contraction)
            gd = lax.dot_general(
                soft_b.astype(jnp.bfloat16), a_map.astype(jnp.bfloat16),
                (((1,), (1,)), ((), ())), preferred_element_type=jnp.float32)   # (c_pad, c_pad)
            gd = gd + bias_row

            # out[j, m] = sum_i gd[i, j] * softV[i, m]   (TN contraction, no transposes)
            out = lax.dot_general(
                gd.astype(jnp.bfloat16), soft_v.astype(jnp.bfloat16),
                (((0,), (0,)), ((), ())), preferred_element_type=jnp.float32)   # (c_pad, n_pad)
            o_ref[bi] = out.astype(o_ref.dtype)

        if bt == 1:
            one_item(0)
        else:
            def body(bi, carry):
                one_item(bi)
                return carry
            lax.fori_loop(0, bt, body, 0)

    return kernel


def double_atten(x, wA, bA, wB, bB, wV, bV):
    """x: (b, c, h, w) float32 NCHW.  Returns (b, c, h, w) float32."""
    b, c, h, w_sp = x.shape
    n = h * w_sp
    c_pad = _round_up(c, 8)
    n_pad = _round_up(n, 128)

    # Spatial-flatten + pad to tile-aligned, lane-dense shapes; cast input to bf16.
    x_flat = x.reshape(b, c, n)
    if (c_pad, n_pad) != (c, n):
        x_flat = jnp.pad(x_flat, ((0, 0), (0, c_pad - c), (0, n_pad - n)))
    x_bf16 = x_flat.astype(jnp.bfloat16)

    def pad_w(wm):
        return jnp.pad(wm, ((0, c_pad - c), (0, c_pad - c))) if c_pad != c else wm

    w_stacked = jnp.concatenate([pad_w(wA), pad_w(wB), pad_w(wV)], axis=0).astype(jnp.bfloat16)
    bias = jnp.pad(bA, (0, c_pad - c)) if c_pad != c else bA
    bias_row = (bias.astype(jnp.float32) / float(n)).reshape(1, c_pad)   # bA / N, wrapper-side

    budget = _vmem_budget_bytes()
    bt = _pick_batch_block(b, c_pad, n_pad, budget)
    grid = (b // bt,)
    kernel = _make_kernel(bt, c_pad, n_pad, c, n)

    out_pad = pl.pallas_call(
        kernel,
        out_shape=jax.ShapeDtypeStruct((b, c_pad, n_pad), jnp.float32),
        grid=grid,
        in_specs=[
            pl.BlockSpec((3 * c_pad, c_pad), lambda i: (0, 0)),    # stacked 1x1-conv weights
            pl.BlockSpec((1, c_pad), lambda i: (0, 0)),            # convA bias / N
            pl.BlockSpec((bt, c_pad, n_pad), lambda i: (i, 0, 0)), # batch block of x
        ],
        out_specs=pl.BlockSpec((bt, c_pad, n_pad), lambda i: (i, 0, 0)),
        compiler_params=pltpu.CompilerParams(
            dimension_semantics=("parallel",),
            vmem_limit_bytes=budget,
        ),
    )(w_stacked, bias_row, x_bf16)

    out = out_pad
    if (c_pad, n_pad) != (c, n):
        out = out[:, :c, :n]
    return out.reshape(b, c, h, w_sp)


def double_atten_reference(x, wA, bA, wB, bB, wV, bV):
    """Pure-JAX f32 replica of the PyTorch forward, for verification."""
    b, c, h, w = x.shape
    n = h * w
    xf = x.reshape(b, c, n)
    A = jnp.einsum('oc,bcn->bon', wA, xf) + bA[None, :, None]
    B = jnp.einsum('oc,bcn->bon', wB, xf) + bB[None, :, None]
    V = jnp.einsum('oc,bcn->bon', wV, xf) + bV[None, :, None]
    fm = A.reshape(b, 1, c, n)
    am = jax.nn.softmax(B.reshape(b, c, 1, n), axis=-1)
    gd = jnp.mean(fm * am, axis=-1)                       # (b, c, c)
    av = jax.nn.softmax(V.reshape(b, c, n), axis=-1)      # (b, c, n)
    out = jnp.einsum('bin,bij->bjn', av, gd)              # (b, c, n)
    return out.reshape(b, c, h, w)


def _make_params(key, c):
    ks = jax.random.split(key, 6)
    scale = 1.0 / jnp.sqrt(float(c))
    wA = jax.random.uniform(ks[0], (c, c), jnp.float32, -scale, scale)
    bA = jax.random.uniform(ks[1], (c,), jnp.float32, -scale, scale)
    wB = jax.random.uniform(ks[2], (c, c), jnp.float32, -scale, scale)
    bB = jax.random.uniform(ks[3], (c,), jnp.float32, -scale, scale)
    wV = jax.random.uniform(ks[4], (c, c), jnp.float32, -scale, scale)
    bV = jax.random.uniform(ks[5], (c,), jnp.float32, -scale, scale)
    return wA, bA, wB, bB, wV, bV


if __name__ == "__main__":
    key = jax.random.PRNGKey(0)
    k_x1, k_p1, k_x2, k_p2 = jax.random.split(key, 4)

    # Test 1: tile-aligned shapes (no padding), Bt=1 per grid step, 2-step parallel grid.
    b1, c1, h1, w1 = 2, 8, 16, 16
    x1 = jax.random.normal(k_x1, (b1, c1, h1, w1), dtype=jnp.float32)
    p1 = _make_params(k_p1, c1)
    out1 = jax.block_until_ready(double_atten(x1, *p1))
    ref1 = double_atten_reference(x1, *p1)
    assert out1.shape == (b1, c1, h1, w1)
    assert jnp.allclose(out1, ref1, atol=5e-3, rtol=5e-2), "mismatch vs reference (aligned case)"

    # Test 2: unaligned shapes (channel + spatial padding with masked softmax) and
    #         Bt>1 (exercises the in-kernel fori_loop batch block).
    b2, c2, h2, w2 = 4, 6, 10, 10
    x2 = jax.random.normal(k_x2, (b2, c2, h2, w2), dtype=jnp.float32)
    p2 = _make_params(k_p2, c2)
    out2 = jax.block_until_ready(double_atten(x2, *p2))
    ref2 = double_atten_reference(x2, *p2)
    assert out2.shape == (b2, c2, h2, w2)
    assert jnp.allclose(out2, ref2, atol=5e-3, rtol=5e-2), "mismatch vs reference (padded case)"

    print("KERNEL_OK")
</pallas_src>

<mosaic_0001>
module attributes {stable_mosaic.version = 11 : i64} {
  func.func @kernel(%arg0: i32, %arg1: memref<24x8xbf16, #tpu.memory_space<vmem>>, %arg2: memref<1x8xf32, #tpu.memory_space<vmem>>, %arg3: memref<1x8x256xbf16, #tpu.memory_space<vmem>>, %arg4: memref<1x8x256xf32, #tpu.memory_space<vmem>>) attributes {dimension_semantics = [#tpu.dimension_semantics<parallel>], iteration_bounds = array<i64: 2>, scalar_prefetch = 0 : i64, scratch_operands = 0 : i64, tpu.core_type = #tpu.core_type<tc>, window_params = [{pipeline_mode = #tpu.pipeline_mode<synchronous>, transform_indices = @transform_0, window_bounds = array<i64: 24, 8>}, {pipeline_mode = #tpu.pipeline_mode<synchronous>, transform_indices = @transform_1, window_bounds = array<i64: 1, 8>}, {transform_indices = @transform_2, window_bounds = array<i64: 1, 8, 256>}, {transform_indices = @transform_3, window_bounds = array<i64: 1, 8, 256>}]} {
    %c0 = arith.constant 0 : index
    %c0_0 = arith.constant 0 : index
    %0 = vector.load %arg1[%c0, %c0_0] : memref<24x8xbf16, #tpu.memory_space<vmem>>, vector<24x8xbf16>
    %c0_1 = arith.constant 0 : index
    %c0_2 = arith.constant 0 : index
    %1 = vector.load %arg2[%c0_1, %c0_2] : memref<1x8xf32, #tpu.memory_space<vmem>>, vector<1x8xf32>
    %c0_3 = arith.constant 0 : index
    %c0_4 = arith.constant 0 : index
    %c0_5 = arith.constant 0 : index
    %2 = vector.load %arg3[%c0_3, %c0_4, %c0_5] : memref<1x8x256xbf16, #tpu.memory_space<vmem>>, vector<1x8x256xbf16>
    %3 = vector.shape_cast %2 : vector<1x8x256xbf16> to vector<8x256xbf16>
    %cst = arith.constant dense<0.000000e+00> : vector<24x256xf32>
    %4 = tpu.matmul %0, %3, %cst {dimension_numbers = #tpu.dot_dimension_numbers<[1], [0], [0], [1], [0, 0, 1, 1], [], []>} : vector<24x8xbf16>, vector<8x256xbf16>, vector<24x256xf32> -> vector<24x256xf32>
    %5 = vector.extract_strided_slice %4 {offsets = [0, 0], sizes = [8, 256], strides = [1, 1]} : vector<24x256xf32> to vector<8x256xf32>
    %6 = vector.extract_strided_slice %4 {offsets = [8, 0], sizes = [8, 256], strides = [1, 1]} : vector<24x256xf32> to vector<8x256xf32>
    %7 = vector.extract_strided_slice %4 {offsets = [16, 0], sizes = [8, 256], strides = [1, 1]} : vector<24x256xf32> to vector<8x256xf32>
    %cst_6 = arith.constant dense<0xFF800000> : vector<8xf32>
    %8 = vector.multi_reduction <maximumf>, %6, %cst_6 [1] : vector<8x256xf32> to vector<8xf32>
    %9 = vector.shape_cast %8 : vector<8xf32> to vector<8x1xf32>
    %10 = vector.broadcast %9 : vector<8x1xf32> to vector<8x256xf32>
    %11 = arith.subf %6, %10 : vector<8x256xf32>
    %12 = math.exp %11 : vector<8x256xf32>
    %cst_7 = arith.constant dense<0.000000e+00> : vector<8xf32>
    %13 = vector.multi_reduction <add>, %12, %cst_7 [1] : vector<8x256xf32> to vector<8xf32>
    %14 = vector.shape_cast %13 : vector<8xf32> to vector<8x1xf32>
    %15 = tpu.reciprocal %14 : vector<8x1xf32> -> vector<8x1xf32>
    %cst_8 = arith.constant 3.906250e-03 : f32
    %16 = vector.broadcast %cst_8 : f32 to vector<8x1xf32>
    %17 = arith.mulf %15, %16 : vector<8x1xf32>
    %18 = vector.broadcast %17 : vector<8x1xf32> to vector<8x256xf32>
    %19 = arith.mulf %12, %18 : vector<8x256xf32>
    %cst_9 = arith.constant dense<0xFF800000> : vector<8xf32>
    %20 = vector.multi_reduction <maximumf>, %7, %cst_9 [1] : vector<8x256xf32> to vector<8xf32>
    %21 = vector.shape_cast %20 : vector<8xf32> to vector<8x1xf32>
    %22 = vector.broadcast %21 : vector<8x1xf32> to vector<8x256xf32>
    %23 = arith.subf %7, %22 : vector<8x256xf32>
    %24 = math.exp %23 : vector<8x256xf32>
    %cst_10 = arith.constant dense<0.000000e+00> : vector<8xf32>
    %25 = vector.multi_reduction <add>, %24, %cst_10 [1] : vector<8x256xf32> to vector<8xf32>
    %26 = vector.shape_cast %25 : vector<8xf32> to vector<8x1xf32>
    %27 = tpu.reciprocal %26 {approx = true} : vector<8x1xf32> -> vector<8x1xf32>
    %28 = vector.broadcast %27 : vector<8x1xf32> to vector<8x256xf32>
    %29 = arith.mulf %24, %28 : vector<8x256xf32>
    %30 = arith.truncf %19 : vector<8x256xf32> to vector<8x256xbf16>
    %31 = arith.truncf %5 : vector<8x256xf32> to vector<8x256xbf16>
    %cst_11 = arith.constant dense<0.000000e+00> : vector<8x8xf32>
    %32 = tpu.matmul %30, %31, %cst_11 {dimension_numbers = #tpu.dot_dimension_numbers<[1], [1], [0], [0], [0, 0, 1, 0], [], []>} : vector<8x256xbf16>, vector<8x256xbf16>, vector<8x8xf32> -> vector<8x8xf32>
    %33 = vector.broadcast %1 : vector<1x8xf32> to vector<8x8xf32>
    %34 = arith.addf %32, %33 : vector<8x8xf32>
    %35 = arith.truncf %34 : vector<8x8xf32> to vector<8x8xbf16>
    %36 = arith.truncf %29 : vector<8x256xf32> to vector<8x256xbf16>
    %cst_12 = arith.constant dense<0.000000e+00> : vector<8x256xf32>
    %37 = tpu.matmul %35, %36, %cst_12 {dimension_numbers = #tpu.dot_dimension_numbers<[0], [0], [1], [1], [0, 1, 1, 1], [], []>} : vector<8x8xbf16>, vector<8x256xbf16>, vector<8x256xf32> -> vector<8x256xf32>
    %c0_13 = arith.constant 0 : index
    %c0_14 = arith.constant 0 : index
    %c0_15 = arith.constant 0 : index
    %38 = vector.load %arg4[%c0_13, %c0_14, %c0_15] : memref<1x8x256xf32, #tpu.memory_space<vmem>>, vector<1x8x256xf32>
    %39 = vector.shape_cast %38 : vector<1x8x256xf32> to vector<8x256xf32>
    %40 = vector.shape_cast %37 : vector<8x256xf32> to vector<1x8x256xf32>
    tpu.vector_store %arg4[%c0_13, %c0_14, %c0_15], %40 {strides = array<i32>} : memref<1x8x256xf32, #tpu.memory_space<vmem>>, vector<1x8x256xf32>,
    return
  }
  func.func @transform_0(%arg0: i32) -> (i32, i32) {
    %c0_i32 = arith.constant 0 : i32
    %c0_i32_0 = arith.constant 0 : i32
    %c0_i32_1 = arith.constant 0 : i32
    return %c0_i32, %c0_i32_0 : i32, i32
  }
  func.func @transform_1(%arg0: i32) -> (i32, i32) {
    %c0_i32 = arith.constant 0 : i32
    %c0_i32_0 = arith.constant 0 : i32
    %c0_i32_1 = arith.constant 0 : i32
    return %c0_i32, %c0_i32_0 : i32, i32
  }
  func.func @transform_2(%arg0: i32) -> (i32, i32, i32) {
    %c0_i32 = arith.constant 0 : i32
    %c0_i32_0 = arith.constant 0 : i32
    %c0_i32_1 = arith.constant 0 : i32
    return %arg0, %c0_i32, %c0_i32_0 : i32, i32, i32
  }
  func.func @transform_3(%arg0: i32) -> (i32, i32, i32) {
    %c0_i32 = arith.constant 0 : i32
    %c0_i32_0 = arith.constant 0 : i32
    %c0_i32_1 = arith.constant 0 : i32
    return %arg0, %c0_i32, %c0_i32_0 : i32, i32, i32
  }
}

</mosaic_0001>

<llo_original>
// kernel: tpu_custom_call.1
$region0: #{tpu_custom_call.1}
  #allocation0 [shape = 'u32[]', space=smem, size = 0x4, offset = 0x4, fixed_abs, tag = 'smem constant byte address 0x4 - core index']
  #allocation1 [shape = 'u32[144,128]{1,0:T(1,128)}', space=vmem, size = 0x12000, scoped, tag = 'internal scratch']
  %s0 = inlined_call_operand.vmem [shape: bf16[24,8], index: 0, kind: input, shape index: {}]
  %s1 = inlined_call_operand.vmem [shape: f32[1,8], index: 1, kind: input, shape index: {}]
  %s2 = inlined_call_operand.vmem [shape: bf16[2,8,256], index: 2, kind: input, shape index: {}]
  %s3 = inlined_call_operand.hbm [shape: f32[2,8,256], index: 3, kind: output, shape index: {}]
  %s4 = sld [smem:[#allocation0]]
  $region45: #{tpu_custom_call.1} parent=0
    _
  %s6 = ssub.s32 1, %s4
  %s7 = scalar_select 0, %s6, %s4
  $region1: #{tpu_custom_call.1} parent=0
    #allocation2 [shape = 'u8[16384]{0}', space=vmem, size = 0x4000, scoped, tag = 'output window, operand 0']
    #allocation3 [shape = 's32[2]{0}', space=sflag, size = 0x8, scoped, tag = 'scoped memory for tpu_custom_call.1']
    %8 = vsyncpa [#allocation3], 0
    %s9 = scalar_lea.sflag [#allocation3], 1
    %10 = vsyncpa %s9, 0
    loop: start=0, step=1, limit=4
    $region2: #{tpu_custom_call.1} parent=1 // loop_pre_header
      _
    $region3: #{tpu_custom_call.1} parent=1 // loop_header
      %s12 = sphi 0, %s16
      %p13 = scmp.ge.s32.totalorder %s12, 4
      %s20 = sphi 0, %s20
      %s22 = sphi 0, %s20
      %s23 = sphi 0, %s22
      %s37 = sphi 0, %s23
      %s41 = sphi 0, %s41
      %s43 = sphi 0, %s41
      %s44 = sphi 0, %s43
      %s58 = sphi 0, %s44
      %s64 = sphi 0, %s66
      %s67 = sphi 0, %s64
      %s68 = sphi 0, %s67
      %s84 = sphi 0, %s68
      %s90 = sphi 0, %s92
      %s93 = sphi 0, %s90
      %s94 = sphi 0, %s93
      %s110 = sphi 0, %s94
    $region4: #{tpu_custom_call.1} parent=1 // loop_header_branch
      %15 = sbr.rel (%p13) target = $region8
    $region5: #{tpu_custom_call.1} parent=1 // loop_body
      %s17 = ssub.s32 %s12, 1
      %s18 = ssub.s32 %s12, 2
      %s19 = sadd.s32 %s12, 1
      %s21 = sadd.s32 %s20, 1
      %p24 = scmp.eq.s32.totalorder %s12, 1
      %p25 = scmp.ne.s32.totalorder %s20, %s22
      %p26 = scmp.eq.s32.totalorder %s12, 0
      %p27 = por %p25, %p26
      %p28 = scmp.ne.s32.totalorder %s20, %s22
      %p29 = scmp.eq.s32.totalorder %s17, 1
      %p30 = por %p28, %p29
      %p31 = scmp.ne.s32.totalorder %s22, %s23
      %p32 = scmp.eq.s32.totalorder %s17, 0
      %p33 = por %p31, %p32
      %p34 = scmp.ne.s32.totalorder %s22, %s23
      %p35 = scmp.eq.s32.totalorder %s18, 1
      %p36 = por %p34, %p35
      %p38 = scmp.ne.s32.totalorder %s23, %s37
      %p39 = scmp.eq.s32.totalorder %s18, 0
      %p40 = por %p38, %p39
      %s42 = sadd.s32 %s41, 1
      %p45 = scmp.eq.s32.totalorder %s12, 1
      %p46 = scmp.ne.s32.totalorder %s41, %s43
      %p47 = scmp.eq.s32.totalorder %s12, 0
      %p48 = por %p46, %p47
      %p49 = scmp.ne.s32.totalorder %s41, %s43
      %p50 = scmp.eq.s32.totalorder %s17, 1
      %p51 = por %p49, %p50
      %p52 = scmp.ne.s32.totalorder %s43, %s44
      %p53 = scmp.eq.s32.totalorder %s17, 0
      %p54 = por %p52, %p53
      %p55 = scmp.ne.s32.totalorder %s43, %s44
      %p56 = scmp.eq.s32.totalorder %s18, 1
      %p57 = por %p55, %p56
      %p59 = scmp.ne.s32.totalorder %s44, %s58
      %p60 = scmp.eq.s32.totalorder %s18, 0
      %p61 = por %p59, %p60
      %s62 = ssub.s32 %s12, %s19
      %p63 = scmp.eq.s32.totalorder %s62, 0
      %s65 = sadd.s32 %s64, 1
      %s66 = scalar_select %p63, %s64, %s65
      %p69 = pneg %p63
      %p70 = scmp.eq.s32.totalorder %s12, 1
      %p71 = por %p69, %p70
      %p72 = scmp.ne.s32.totalorder %s64, %s67
      %p73 = scmp.eq.s32.totalorder %s12, 0
      %p74 = por %p72, %p73
      %p75 = scmp.ne.s32.totalorder %s64, %s67
      %p76 = scmp.eq.s32.totalorder %s17, 1
      %p77 = por %p75, %p76
      %p78 = scmp.ne.s32.totalorder %s67, %s68
      %p79 = scmp.eq.s32.totalorder %s17, 0
      %p80 = por %p78, %p79
      %p81 = scmp.ne.s32.totalorder %s67, %s68
      %p82 = scmp.eq.s32.totalorder %s18, 1
      %p83 = por %p81, %p82
      %p85 = scmp.ne.s32.totalorder %s68, %s84
      %p86 = scmp.eq.s32.totalorder %s18, 0
      %p87 = por %p85, %p86
      %s88 = ssub.s32 %s12, %s19
      %p89 = scmp.eq.s32.totalorder %s88, 0
      %s91 = sadd.s32 %s90, 1
      %s92 = scalar_select %p89, %s90, %s91
      %p95 = pneg %p89
      %p96 = scmp.eq.s32.totalorder %s12, 1
      %p97 = por %p95, %p96
      %p98 = scmp.ne.s32.totalorder %s90, %s93
      %p99 = scmp.eq.s32.totalorder %s12, 0
      %p100 = por %p98, %p99
      %p101 = scmp.ne.s32.totalorder %s90, %s93
      %p102 = scmp.eq.s32.totalorder %s17, 1
      %p103 = por %p101, %p102
      %p104 = scmp.ne.s32.totalorder %s93, %s94
      %p105 = scmp.eq.s32.totalorder %s17, 0
      %p106 = por %p104, %p105
      %p107 = scmp.ne.s32.totalorder %s93, %s94
      %p108 = scmp.eq.s32.totalorder %s18, 1
      %p109 = por %p107, %p108
      %p111 = scmp.ne.s32.totalorder %s94, %s110
      %p112 = scmp.eq.s32.totalorder %s18, 0
      %p113 = por %p111, %p112
      %p114 = scmp.le.s32.totalorder 1, %s12
      %p115 = scmp.lt.s32.totalorder %s12, 3
      %p116 = pnand %p114, %p115
      %p117 = pneg %p116
      // Predicated region
      $region9: #{tpu_custom_call.1} parent=5 // pred_check
        _
      $region10: #{tpu_custom_call.1} parent=5 // pred_check_branch
        %119 = sbr.rel (%p116) target = $region12
      $region11: #{tpu_custom_call.1} parent=5 // pred_region
        %s120 = ssub.s32 %s12, 1
        // Predicated region
        $region13: #{tpu_custom_call.1} parent=11 // pred_check
          %p121 = pneg %p33
        $region14: #{tpu_custom_call.1} parent=11 // pred_check_branch
          %123 = sbr.rel (%p121) target = $region16
        $region15: #{tpu_custom_call.1} parent=11 // pred_region
          _
        $region16: #{tpu_custom_call.1} parent=11 // pred_fallthru
          _
        // Predicated region
        $region17: #{tpu_custom_call.1} parent=11 // pred_check
          %p124 = pneg %p54
        $region18: #{tpu_custom_call.1} parent=11 // pred_check_branch
          %126 = sbr.rel (%p124) target = $region20
        $region19: #{tpu_custom_call.1} parent=11 // pred_region
          _
        $region20: #{tpu_custom_call.1} parent=11 // pred_fallthru
          _
      $region12: #{tpu_custom_call.1} parent=5 // pred_fallthru
        _
      %p127 = scmp.lt.s32.totalorder %s12, 2
      // Predicated region
      $region21: #{tpu_custom_call.1} parent=5 // pred_check
        %p128 = pneg %p127
      $region22: #{tpu_custom_call.1} parent=5 // pred_check_branch
        %130 = sbr.rel (%p128) target = $region24
      $region23: #{tpu_custom_call.1} parent=5 // pred_region
        // Predicated region
        $region25: #{tpu_custom_call.1} parent=23 // pred_check
          %p131 = pneg %p74
        $region26: #{tpu_custom_call.1} parent=23 // pred_check_branch
          %133 = sbr.rel (%p131) target = $region28
        $region27: #{tpu_custom_call.1} parent=23 // pred_region
          %p134 = scmp.lt.s32.totalorder %s12, 1
          %s135 = scalar_select %p134, %s12, 1
          %s136 = smul.addr %s135, 2
          %s137 = smul.addr %s136, 4
          %s138 = scalar_lea.vmem %s2, %s137
        $region28: #{tpu_custom_call.1} parent=23 // pred_fallthru
          _
      $region24: #{tpu_custom_call.1} parent=5 // pred_fallthru
        _
      %p139 = scmp.le.s32.totalorder 1, %s12
      %p140 = scmp.lt.s32.totalorder %s12, 3
      %p141 = pnand %p139, %p140
      %p142 = pneg %p141
      // Predicated region
      $region29: #{tpu_custom_call.1} parent=5 // pred_check
        _
      $region30: #{tpu_custom_call.1} parent=5 // pred_check_branch
        %144 = sbr.rel (%p141) target = $region32
      $region31: #{tpu_custom_call.1} parent=5 // pred_region
        %s145 = ssub.s32 %s12, 1
        %p146 = pneg %p33
        %p147 = pneg %p30
        %p148 = pneg %p54
        %p149 = pneg %p51
        %p150 = scmp.lt.s32.totalorder %s17, 1
        %s151 = scalar_select %p150, %s17, 1
        %s152 = smul.addr %s151, 2
        %s153 = smul.addr %s152, 4
        %s154 = scalar_lea.vmem %s2, %s153
        %p155 = pneg %p80
        %p156 = pneg %p77
        %p157 = pneg %p106
        %p158 = pneg %p103
        %s159 = sand.u32 %s93, 1
        %s160 = scalar_lea.sflag [#allocation3], %s159
        %s161 = sand.u32 %s93, 1
        %s162 = smul.addr %s161, 16
        %s163 = scalar_lea.vmem [#allocation2], %s162
        %p164 = scmp.lt.s32.totalorder %s17, 1
        %s165 = scalar_select %p164, %s17, 1
        %s166 = smul.addr %s165, 2
        %s167 = smul.addr %s166, 4
        %s168 = scalar_lea.vmem %s2, %s167
        %v170 = vld [vmem:[%s0] sm:$0xf]
        %v171 = vld [vmem:[%s0 + $0x4] sm:$0xf]
        %v172 = vld [vmem:[%s0 + $0x8] sm:$0xf]
        %v173 = vld [vmem:[%s1] sm:$0x1]
        %v174 = vld [vmem:[%s168] sm:$0xff]
        %v178 = vunpack.c.l.b16 %v170
        %v179 = vunpack.c.l.b16 %v171
        %v180 = vunpack.c.l.b16 %v172
        %v181 = vpack.c.b16 %v179, %v178
        %v182 = vpack.c.b16 %v180, %v180
        %v184 = vunpack.c.l.b16 %v174
        %v185 = vunpack.c.h.b16 %v174
        %v186 = vpack.c.b16 %v184, %v184
        %v187 = vpack.c.b16 %v185, %v185
        %vm188 = vcmask 64512
        %v190 = vsel %vm188, %v181, 0
        %v193 = vsel %vm188, %v182, 0
        %vm195 = vcmask 1043456
        %v197 = vsel %vm195, %v186, 0
        %v200 = vsel %vm195, %v187, 0
        %202 = vmatprep.subr.bf16.mxu0 %v200
        %203 = vmatpush1.bf16.msra.mxu0 %v197
        %204 = vmatprep.subr.bf16.mxu0 0
        %205 = vmatpush1.bf16.msra.mxu0 0
        %206 = vmatprep.subr.bf16.mxu0 0
        %207 = vmatpush1.bf16.msra.mxu0 0
        %208 = vmatprep.subr.bf16.mxu0 0
        %209 = vmatpush1.bf16.msra.mxu0 0
        %210 = vmatprep.subr.bf16.mxu0 0
        %211 = vmatpush1.bf16.msra.mxu0 0
        %212 = vmatprep.subr.bf16.mxu0 0
        %213 = vmatpush1.bf16.msra.mxu0 0
        %214 = vmatprep.subr.bf16.mxu0 0
        %215 = vmatpush1.bf16.msra.mxu0 0
        %216 = vmatprep.subr.bf16.mxu0 0
        %217 = vmatpush1.bf16.msra.mxu0 0
        %218 = vmatprep.subr.bf16.mxu0 0
        %219 = vmatpush1.bf16.msra.mxu0 0
        %220 = vmatprep.subr.bf16.mxu0 0
        %221 = vmatpush1.bf16.msra.mxu0 0
        %222 = vmatprep.subr.bf16.mxu0 0
        %223 = vmatpush1.bf16.msra.mxu0 0
        %224 = vmatprep.subr.bf16.mxu0 0
        %225 = vmatpush1.bf16.msra.mxu0 0
        %226 = vmatprep.subr.bf16.mxu0 0
        %227 = vmatpush1.bf16.msra.mxu0 0
        %228 = vmatprep.subr.bf16.mxu0 0
        %229 = vmatpush1.bf16.msra.mxu0 0
        %230 = vmatprep.subr.bf16.mxu0 0
        %231 = vmatpush1.bf16.msra.mxu0 0
        %232 = vmatprep.subr.bf16.mxu0 0
        %233 = vmatpush1.bf16.msra.mxu0 0
        %234 = vmatprep.mubr.bf16.mxu0 0
        %235 = vmatmul.mubr.bf16.gmra.mrb[0].mxu0 %v190
        %v236 = vpop.f32.mrb[0].mxu0
        %v237 = vadd.f32 0.0, %v236
        %v238 = vpop.f32.mrb[0].mxu0
        %v239 = vadd.f32 0.0, %v238
        %v240 = vpop.f32.mrb[0].mxu0
        %v241 = vadd.f32 0.0, %v240
        %v242 = vpop.f32.mrb[0].mxu0
        %v243 = vadd.f32 0.0, %v242
        %244 = vmatprep.mubr.bf16.mxu0 0
        %245 = vmatmul.mubr.bf16.gmra.mrb[0].mxu0 %v193
        %v246 = vpop.f32.mrb[0].mxu0
        %v247 = vadd.f32 0.0, %v246
        %v248 = vpop.f32.mrb[0].mxu0
        %v249 = vadd.f32 0.0, %v248
        %v250 = vpop.f32.mrb[0].mxu0
        %v251 = vpop.f32.mrb[0].mxu0
        %252 = vdwg.mxu0
        %v253 = vmax.f32 %v241, %v243
        %254 = vmax.xlane.f32.xlu0 %v253
        %v255 = vpop.xlane.xlu0 %254
        %v256 = vsub.f32 %v241, %v255
        %v257 = vsub.f32 %v243, %v255
        %v258 = vmul.f32 %v256, 1.442695
        %v259 = vpow.pop %v258
        %v260 = vmul.f32 %v257, 1.442695
        %v261 = vpow.pop %v260
        %v262 = vadd.f32 %v259, %v261
        %263 = vadd.xlane.f32.xlu0 %v262
        %v264 = vpop.xlane.xlu0 %263
        %v265 = vrcp.pop %v264
        %v266 = vmul.f32 %v265, 0.00390625
        %v267 = vmul.f32 %v259, %v266
        %v268 = vmul.f32 %v261, %v266
        %v269 = vmax.f32 %v247, %v249
        %270 = vmax.xlane.f32.xlu0 %v269
        %v271 = vpop.xlane.xlu0 %270
        %v272 = vsub.f32 %v247, %v271
        %v273 = vsub.f32 %v249, %v271
        %v274 = vmul.f32 %v272, 1.442695
        %v275 = vpow.pop %v274
        %v276 = vmul.f32 %v273, 1.442695
        %v277 = vpow.pop %v276
        %v278 = vadd.f32 %v275, %v277
        %279 = vadd.xlane.f32.xlu0 %v278
        %v280 = vpop.xlane.xlu0 %279
        %v281 = vrcp.pop %v280
        %v282 = vmul.f32 %v275, %v281
        %v283 = vmul.f32 %v277, %v281
        %v284 = vpack.c.bf16 %v267, %v267
        %v285 = vpack.c.bf16 %v268, %v268
        %v286 = vpack.c.bf16 %v237, %v237
        %v287 = vpack.c.bf16 %v239, %v239
        %v289 = vlaneseq
        %v290 = vshrl.u32 %v289, 7
        %v291 = vsub.s32 0, %v290
        %v292 = vrot.slane %v173, %v291
        %294 = vmatprep.subr.bf16.mxu0 %v287
        %295 = vmatpush1.bf16.xpose.msra.mxu0 %v286
        %296 = vmatprep.subr.bf16.mxu0 0
        %297 = vmatpush1.bf16.xpose.msra.mxu0 0
        %298 = vmatprep.subr.bf16.mxu0 0
        %299 = vmatpush1.bf16.xpose.msra.mxu0 0
        %300 = vmatprep.subr.bf16.mxu0 0
        %301 = vmatpush1.bf16.xpose.msra.mxu0 0
        %302 = vmatprep.subr.bf16.mxu0 0
        %303 = vmatpush1.bf16.xpose.msra.mxu0 0
        %304 = vmatprep.subr.bf16.mxu0 0
        %305 = vmatpush1.bf16.xpose.msra.mxu0 0
        %306 = vmatprep.subr.bf16.mxu0 0
        %307 = vmatpush1.bf16.xpose.msra.mxu0 0
        %308 = vmatprep.subr.bf16.mxu0 0
        %309 = vmatpush1.bf16.xpose.msra.mxu0 0
        %310 = vmatprep.subr.bf16.mxu0 0
        %311 = vmatpush1.bf16.xpose.msra.mxu0 0
        %312 = vmatprep.subr.bf16.mxu0 0
        %313 = vmatpush1.bf16.xpose.msra.mxu0 0
        %314 = vmatprep.subr.bf16.mxu0 0
        %315 = vmatpush1.bf16.xpose.msra.mxu0 0
        %316 = vmatprep.subr.bf16.mxu0 0
        %317 = vmatpush1.bf16.xpose.msra.mxu0 0
        %318 = vmatprep.subr.bf16.mxu0 0
        %319 = vmatpush1.bf16.xpose.msra.mxu0 0
        %320 = vmatprep.subr.bf16.mxu0 0
        %321 = vmatpush1.bf16.xpose.msra.mxu0 0
        %322 = vmatprep.subr.bf16.mxu0 0
        %323 = vmatpush1.bf16.xpose.msra.mxu0 0
        %324 = vmatprep.subr.bf16.mxu0 0
        %325 = vmatpush1.bf16.xpose.msra.mxu0 0
        %326 = vmatprep.mubr.bf16.mxu0 %v285
        %327 = vmatmul.mubr.bf16.gmra.mrb[0].mxu0 %v284
        %v328 = vpop.f32.mrb[0].mxu0
        %v329 = vadd.f32 %v292, %v328
        %v330 = vpop.f32.mrb[0].mxu0
        %v331 = vpop.f32.mrb[0].mxu0
        %v332 = vpop.f32.mrb[0].mxu0
        %333 = vdwg.mxu0
        %v334 = vpack.c.bf16 %v329, %v329
        %v335 = vpack.c.bf16 %v282, %v282
        %v336 = vpack.c.bf16 %v283, %v283
        %337 = vxpose.xlu0.c.b16.start [1/8] %v334, 128
        %338 = vxpose.xlu0.c.b16.cont [2/8] 0, 128
        %339 = vxpose.xlu0.c.b16.cont [3/8] 0, 128
        %340 = vxpose.xlu0.c.b16.cont [4/8] 0, 128
        %341 = vxpose.xlu0.c.b16.cont [5/8] 0, 128
        %342 = vxpose.xlu0.c.b16.cont [6/8] 0, 128
        %343 = vxpose.xlu0.c.b16.cont [7/8] 0, 128
        %344 = vxpose.xlu0.c.b16.end [8/8] 0, 128
        %v345 = vpop.trf.xlu0
        %v346 = vpop.trf.xlu0
        %v347 = vpop.trf.xlu0
        %v348 = vpop.trf.xlu0
        %v349 = vpop.trf.xlu0
        %v350 = vpop.trf.xlu0
        %v351 = vpop.trf.xlu0
        %v352 = vpop.trf.xlu0
        %v354 = vsel %vm188, %v345, 0
        %v357 = vsel %vm195, %v335, 0
        %v360 = vsel %vm195, %v336, 0
        %362 = vmatprep.subr.bf16.mxu0 %v360
        %363 = vmatpush1.bf16.msra.mxu0 %v357
        %364 = vmatprep.subr.bf16.mxu0 0
        %365 = vmatpush1.bf16.msra.mxu0 0
        %366 = vmatprep.subr.bf16.mxu0 0
        %367 = vmatpush1.bf16.msra.mxu0 0
        %368 = vmatprep.subr.bf16.mxu0 0
        %369 = vmatpush1.bf16.msra.mxu0 0
        %370 = vmatprep.subr.bf16.mxu0 0
        %371 = vmatpush1.bf16.msra.mxu0 0
        %372 = vmatprep.subr.bf16.mxu0 0
        %373 = vmatpush1.bf16.msra.mxu0 0
        %374 = vmatprep.subr.bf16.mxu0 0
        %375 = vmatpush1.bf16.msra.mxu0 0
        %376 = vmatprep.subr.bf16.mxu0 0
        %377 = vmatpush1.bf16.msra.mxu0 0
        %378 = vmatprep.subr.bf16.mxu0 0
        %379 = vmatpush1.bf16.msra.mxu0 0
        %380 = vmatprep.subr.bf16.mxu0 0
        %381 = vmatpush1.bf16.msra.mxu0 0
        %382 = vmatprep.subr.bf16.mxu0 0
        %383 = vmatpush1.bf16.msra.mxu0 0
        %384 = vmatprep.subr.bf16.mxu0 0
        %385 = vmatpush1.bf16.msra.mxu0 0
        %386 = vmatprep.subr.bf16.mxu0 0
        %387 = vmatpush1.bf16.msra.mxu0 0
        %388 = vmatprep.subr.bf16.mxu0 0
        %389 = vmatpush1.bf16.msra.mxu0 0
        %390 = vmatprep.subr.bf16.mxu0 0
        %391 = vmatpush1.bf16.msra.mxu0 0
        %392 = vmatprep.subr.bf16.mxu0 0
        %393 = vmatpush1.bf16.msra.mxu0 0
        %394 = vmatprep.mubr.bf16.mxu0 0
        %395 = vmatmul.mubr.bf16.gmra.mrb[0].mxu0 %v354
        %v396 = vpop.f32.mrb[0].mxu0
        %v397 = vadd.f32 0.0, %v396
        %v398 = vpop.f32.mrb[0].mxu0
        %v399 = vadd.f32 0.0, %v398
        %v400 = vpop.f32.mrb[0].mxu0
        %v401 = vpop.f32.mrb[0].mxu0
        %402 = vdwg.mxu0
        %403 = vst [vmem:[%s163] sm:$0xff] %v397
        %404 = vst [vmem:[%s163 + $0x8] sm:$0xff] %v399
        %s405 = sand.u32 %s93, 1
        %s406 = scalar_lea.sflag [#allocation3], %s405
        %s407 = sand.u32 %s93, 1
        %s408 = smul.addr %s407, 16
        %s409 = scalar_lea.vmem [#allocation2], %s408
        // Predicated region
        $region33: #{tpu_custom_call.1} parent=31 // pred_check
          %p410 = pneg %p103
        $region34: #{tpu_custom_call.1} parent=31 // pred_check_branch
          %412 = sbr.rel (%p410) target = $region36
        $region35: #{tpu_custom_call.1} parent=31 // pred_region
          %s414 = ssub.s32 256, 256
          %415 = vsyncadd %s406, %s414
          %s416 = smul.addr %s17, 2
          %s417 = smul.addr %s416, 128
          %s418 = scalar_lea.hbm %s3, %s417
          %s420 = sshll.u32 %s409, 4
          %s421 = int_to_ptr.vmem [resolvable:$true] %s420
          %423 = dma.vmem_to_hbm [thread:$0]  %s421, 256, %s418, %s406
        $region36: #{tpu_custom_call.1} parent=31 // pred_fallthru
          _
      $region32: #{tpu_custom_call.1} parent=5 // pred_fallthru
        _
      %p424 = scmp.le.s32.totalorder 2, %s12
      // Predicated region
      $region37: #{tpu_custom_call.1} parent=5 // pred_check
        %p425 = pneg %p424
      $region38: #{tpu_custom_call.1} parent=5 // pred_check_branch
        %427 = sbr.rel (%p425) target = $region40
      $region39: #{tpu_custom_call.1} parent=5 // pred_region
        %s428 = ssub.s32 %s12, 2
        // Predicated region
        $region41: #{tpu_custom_call.1} parent=39 // pred_check
          %p429 = pneg %p109
        $region42: #{tpu_custom_call.1} parent=39 // pred_check_branch
          %431 = sbr.rel (%p429) target = $region44
        $region43: #{tpu_custom_call.1} parent=39 // pred_region
          %s432 = sand.u32 %s94, 1
          %s433 = scalar_lea.sflag [#allocation3], %s432
          %s434 = sand.u32 %s94, 1
          %s435 = smul.addr %s434, 16
          %s436 = scalar_lea.vmem [#allocation2], %s435
          %437 = dma.done %s433, 256
        $region44: #{tpu_custom_call.1} parent=39 // pred_fallthru
          _
      $region40: #{tpu_custom_call.1} parent=5 // pred_fallthru
        _
    $region6: #{tpu_custom_call.1} parent=1 // loop_footer
      %s16 = sadd.s32 1, %s12
    $region7: #{tpu_custom_call.1} parent=1 // loop_footer_branch
      %11 = sbr.rel target = $region3
    $region8: #{tpu_custom_call.1} parent=1 // loop_exit
      _
    %438 = vsyncpa [#allocation3], 1
    %s439 = scalar_lea.sflag [#allocation3], 1
    %440 = vsyncpa %s439, 1

</llo_original>
